<compile_context>
chip_gen: v7x
topology: tpu7x:2x2x1
jax: 0.10.0
libtpu: 0.0.40
codegen_flags: <defaults>
</compile_context>

<pallas_src>
import jax
import jax.numpy as jnp
from jax import lax
from jax.experimental import pallas as pl
from jax.experimental.pallas import tpu as pltpu

_SUBLANE = 8
_MIB = 1024 * 1024


def _round_down(x: int, m: int) -> int:
    return (x // m) * m


def _round_up(x: int, m: int) -> int:
    return ((x + m - 1) // m) * m


def _sublane_granularity(dtype) -> int:
    """Row granularity respecting packed sublane tiling: 8 (f32), 16 (bf16), 32 (i8/fp8)."""
    itemsize = dtype.itemsize
    return _SUBLANE * max(1, 4 // max(1, itemsize))


def _tpu_info():
    try:
        return pltpu.get_tpu_info()
    except Exception:
        return None


def _num_tensorcores(info) -> int:
    """Best-effort TensorCore count; defaults to 1 (no split) when unknown."""
    if info is None:
        return 1
    for attr in ("num_cores", "core_count", "num_tensorcores", "tensorcore_count",
                 "num_tensor_cores", "cores_per_chip", "tensorcores_per_chip"):
        n = getattr(info, attr, None)
        if isinstance(n, int) and n > 1:
            return n
    return 1


def _make_score_mse_kernel(batch_rows: int, feat_dim: int,
                           tile_rows: int, chunk_rows: int):
    """Accumulates sum((pred - true)^2) for this core's tiles into an (8, D) slab."""
    num_chunks = tile_rows // chunk_rows

    def kernel(pred_ref, true_ref, out_ref):
        s = pl.program_id(0)   # core split (CORE_PARALLEL on multi-TC chips)
        t = pl.program_id(1)   # reduction axis: tiles within this split

        @pl.when(t == 0)
        def _():
            # Output block index is constant along t -> VMEM-resident accumulator.
            out_ref[...] = jnp.zeros(out_ref.shape, out_ref.dtype)

        # True (unclamped) global tile start row.  The index_map clamps phantom
        # tiles onto the last real one; the row mask below zeroes both their
        # contribution and the padded tail of the last real tile.
        tile_row0 = (s * pl.num_programs(1) + t) * tile_rows

        def fold_chunk(c, acc):
            r0 = c * chunk_rows
            p = pred_ref[pl.ds(r0, chunk_rows), :].astype(jnp.float32)
            q = true_ref[pl.ds(r0, chunk_rows), :].astype(jnp.float32)
            d = p - q
            d2 = d * d
            rows = tile_row0 + r0 + lax.broadcasted_iota(
                jnp.int32, (chunk_rows, feat_dim), 0)
            d2 = jnp.where(rows < batch_rows, d2, 0.0)
            # Fold chunk rows onto the 8 sublanes of the accumulator: the
            # reshape is layout-preserving and the axis-0 sum is pure VPU vreg
            # adds — no per-step cross-lane (XLU) reduction.
            return acc + jnp.sum(d2.reshape(chunk_rows // 8, 8, feat_dim), axis=0)

        acc = lax.fori_loop(0, num_chunks, fold_chunk,
                            jnp.zeros((8, feat_dim), jnp.float32),
                            unroll=True)
        out_ref[0, :, :] += acc

    return kernel


def score_loss_mse(y_pred: jax.Array,
                   y_true: jax.Array,
                   *,
                   tile_rows: int | None = None,
                   vmem_input_budget_bytes: int = 16 * _MIB,
                   max_tile_rows: int = 16384,
                   eps: float = 0.0) -> jax.Array:
    """ScoreLoss with an MSE inner loss: returns 1 / (MSE(y_pred, y_true) + eps)."""
    assert y_pred.shape == y_true.shape and y_pred.ndim == 2
    B, D = y_pred.shape

    itemsize = max(y_pred.dtype.itemsize, y_true.dtype.itemsize)
    gran = max(_sublane_granularity(y_pred.dtype), _sublane_granularity(y_true.dtype))

    info = _tpu_info()
    vmem_cap = getattr(info, "vmem_capacity_bytes", None) if info is not None else None
    if isinstance(vmem_cap, int) and vmem_cap > 0:
        # e.g. v7x only has 64 MiB of physical VMEM per TC.
        vmem_input_budget_bytes = min(vmem_input_budget_bytes, vmem_cap // 4)

    # --- byte-budgeted tile size (2 inputs x 2 pipeline buffers) -------------
    if tile_rows is None:
        per_block_budget = max(vmem_input_budget_bytes // 4, gran * D * itemsize)
        tile_rows = per_block_budget // (D * itemsize)
        tile_rows = min(tile_rows, max_tile_rows, _round_up(B, gran))
    tile_rows = max(_round_down(int(tile_rows), gran), gran)
    chunk_rows = min(tile_rows, 512)
    if tile_rows > chunk_rows:
        tile_rows = _round_down(tile_rows, chunk_rows)
    assert tile_rows % chunk_rows == 0 and chunk_rows % 8 == 0

    # --- grid: optional core split (outer) x reduction tiles (inner) ---------
    tiles_total = pl.cdiv(B, tile_rows)
    n_splits = max(1, min(_num_tensorcores(info), tiles_total))
    tiles_per_split = pl.cdiv(tiles_total, n_splits)

    def in_index_map(s, t):
        # Clamp phantom tiles (when tiles_total doesn't divide by n_splits) onto
        # the last real tile; the kernel's row mask makes them contribute zero.
        g = jnp.minimum(s * tiles_per_split + t, tiles_total - 1)
        return (g, 0)

    # VMEM limit: double-buffered inputs + headroom for output slab / temps.
    input_buffer_bytes = 2 * 2 * tile_rows * D * itemsize
    vmem_limit = int(min(48 * _MIB, max(16 * _MIB, input_buffer_bytes + 8 * _MIB)))
    if isinstance(vmem_cap, int) and vmem_cap > 0:
        vmem_limit = min(vmem_limit, max(16 * _MIB, vmem_cap - 8 * _MIB))

    axis0_sem = pltpu.CORE_PARALLEL if n_splits > 1 else pltpu.ARBITRARY

    kernel = _make_score_mse_kernel(B, D, tile_rows, chunk_rows)

    # TODO(synk): for D not a multiple of 128, padding D to the lane width (and
    # excluding the padding from the mean divisor) would keep vregs fully dense.
    partials = pl.pallas_call(
        kernel,
        out_shape=jax.ShapeDtypeStruct((n_splits, 8, D), jnp.float32),
        grid_spec=pltpu.PrefetchScalarGridSpec(
            num_scalar_prefetch=0,
            grid=(n_splits, tiles_per_split),
            in_specs=[
                pl.BlockSpec((tile_rows, D), in_index_map),
                pl.BlockSpec((tile_rows, D), in_index_map),
            ],
            out_specs=pl.BlockSpec((1, 8, D), lambda s, t: (s, 0, 0)),
        ),
        compiler_params=pltpu.CompilerParams(
            dimension_semantics=(axis0_sem, pltpu.ARBITRARY),
            vmem_limit_bytes=vmem_limit,
        ),
        cost_estimate=pl.CostEstimate(
            flops=3 * B * D,
            transcendentals=0,
            bytes_accessed=int(B * D * (y_pred.dtype.itemsize + y_true.dtype.itemsize)
                               + n_splits * 8 * D * 4),
        ),
    )(y_pred, y_true)

    # Tiny combine: sum of n_splits*8*D partials -> mean -> ScoreLoss = 1/loss.
    mse = jnp.sum(partials) / (B * D)
    return 1.0 / (mse + eps)


if __name__ == "__main__":
    key = jax.random.PRNGKey(0)
    k1, k2 = jax.random.split(key)

    # Small (batch, features) inputs consistent with a generic loss module.
    B, D = 1024, 128
    y_pred = jax.random.normal(k1, (B, D), dtype=jnp.float32)
    y_true = jax.random.normal(k2, (B, D), dtype=jnp.float32)

    # 1) Auto (byte-budgeted) tiling: whole batch fits in one tile.
    ref1 = 1.0 / jnp.mean((y_pred - y_true) ** 2)
    s1 = score_loss_mse(y_pred, y_true)

    # 2) Forced multi-tile path with a ragged batch (B2 not a multiple of the
    #    tile or even of 8) to exercise cross-step accumulation + tail masking.
    B2 = 1000
    yp2, yt2 = y_pred[:B2], y_true[:B2]
    ref2 = 1.0 / jnp.mean((yp2 - yt2) ** 2)
    s2 = score_loss_mse(yp2, yt2, tile_rows=256)

    jax.block_until_ready((s1, s2))

    assert jnp.allclose(s1, ref1, rtol=1e-4), (s1, ref1)
    assert jnp.allclose(s2, ref2, rtol=1e-4), (s2, ref2)

    print("KERNEL_OK")
</pallas_src>

<mosaic_0001>
module attributes {stable_mosaic.version = 11 : i64} {
  func.func @kernel(%arg0: i32, %arg1: i32, %arg2: memref<1024x128xf32, #tpu.memory_space<vmem>>, %arg3: memref<1024x128xf32, #tpu.memory_space<vmem>>, %arg4: memref<1x8x128xf32, #tpu.memory_space<vmem>>) attributes {dimension_semantics = [#tpu.dimension_semantics<arbitrary>, #tpu.dimension_semantics<arbitrary>], iteration_bounds = array<i64: 1, 1>, scalar_prefetch = 0 : i64, scratch_operands = 0 : i64, tpu.core_type = #tpu.core_type<tc>, window_params = [{transform_indices = @transform_0, window_bounds = array<i64: 1024, 128>}, {transform_indices = @transform_1, window_bounds = array<i64: 1024, 128>}, {transform_indices = @transform_2, window_bounds = array<i64: 1, 8, 128>}]} {
    %c0_i32 = arith.constant 0 : i32
    %0 = arith.cmpi eq, %arg1, %c0_i32 : i32
    %1 = arith.extui %0 : i1 to i32
    %c0_i32_0 = arith.constant 0 : i32
    %2 = arith.cmpi ne, %1, %c0_i32_0 : i32
    scf.if %2 {
      %cst_19 = arith.constant 0.000000e+00 : f32
      %49 = vector.broadcast %cst_19 : f32 to vector<1x8x128xf32>
      %c0_20 = arith.constant 0 : index
      %c0_21 = arith.constant 0 : index
      %c0_22 = arith.constant 0 : index
      %50 = vector.load %arg4[%c0_20, %c0_21, %c0_22] : memref<1x8x128xf32, #tpu.memory_space<vmem>>, vector<1x8x128xf32>
      tpu.vector_store %arg4[%c0_20, %c0_21, %c0_22], %49 {strides = array<i32>} : memref<1x8x128xf32, #tpu.memory_space<vmem>>, vector<1x8x128xf32>,
    } else {
    }
    %c1_i32 = arith.constant 1 : i32
    %3 = arith.muli %arg0, %c1_i32 : i32
    %4 = arith.addi %3, %arg1 : i32
    %c1024_i32 = arith.constant 1024 : i32
    %5 = arith.muli %4, %c1024_i32 : i32
    %cst = arith.constant 0.000000e+00 : f32
    %6 = vector.broadcast %cst : f32 to vector<8x128xf32>
    %c0_i32_1 = arith.constant 0 : i32
    %c512_i32 = arith.constant 512 : i32
    %7 = arith.muli %c0_i32_1, %c512_i32 : i32
    %8 = arith.index_cast %7 : i32 to index
    %c0 = arith.constant 0 : index
    %9 = vector.load %arg2[%8, %c0] : memref<1024x128xf32, #tpu.memory_space<vmem>>, vector<512x128xf32>
    %10 = arith.index_cast %7 : i32 to index
    %c0_2 = arith.constant 0 : index
    %11 = vector.load %arg3[%10, %c0_2] : memref<1024x128xf32, #tpu.memory_space<vmem>>, vector<512x128xf32>
    %12 = arith.subf %9, %11 : vector<512x128xf32>
    %13 = arith.mulf %12, %12 : vector<512x128xf32>
    %14 = arith.addi %5, %7 : i32
    %15 = tpu.iota {dimensions = array<i32: 0>} : vector<512x128xi32>
    %16 = vector.broadcast %14 : i32 to vector<512x128xi32>
    %17 = arith.addi %16, %15 : vector<512x128xi32>
    %c1024_i32_3 = arith.constant 1024 : i32
    %18 = vector.broadcast %c1024_i32_3 : i32 to vector<512x128xi32>
    %19 = arith.cmpi slt, %17, %18 : vector<512x128xi32>
    %cst_4 = arith.constant 0.000000e+00 : f32
    %20 = vector.broadcast %cst_4 : f32 to vector<512x128xf32>
    %21 = arith.select %19, %13, %20 : vector<512x128xi1>, vector<512x128xf32>
    %22 = vector.shape_cast %21 : vector<512x128xf32> to vector<64x8x128xf32>
    %cst_5 = arith.constant dense<0.000000e+00> : vector<8x128xf32>
    %23 = vector.multi_reduction <add>, %22, %cst_5 [0] : vector<64x8x128xf32> to vector<8x128xf32>
    %24 = arith.addf %6, %23 : vector<8x128xf32>
    %c1_i32_6 = arith.constant 1 : i32
    %c512_i32_7 = arith.constant 512 : i32
    %25 = arith.muli %c1_i32_6, %c512_i32_7 : i32
    %26 = arith.index_cast %25 : i32 to index
    %c0_8 = arith.constant 0 : index
    %27 = vector.load %arg2[%26, %c0_8] : memref<1024x128xf32, #tpu.memory_space<vmem>>, vector<512x128xf32>
    %28 = arith.index_cast %25 : i32 to index
    %c0_9 = arith.constant 0 : index
    %29 = vector.load %arg3[%28, %c0_9] : memref<1024x128xf32, #tpu.memory_space<vmem>>, vector<512x128xf32>
    %30 = arith.subf %27, %29 : vector<512x128xf32>
    %31 = arith.mulf %30, %30 : vector<512x128xf32>
    %32 = arith.addi %5, %25 : i32
    %33 = tpu.iota {dimensions = array<i32: 0>} : vector<512x128xi32>
    %34 = vector.broadcast %32 : i32 to vector<512x128xi32>
    %35 = arith.addi %34, %33 : vector<512x128xi32>
    %c1024_i32_10 = arith.constant 1024 : i32
    %36 = vector.broadcast %c1024_i32_10 : i32 to vector<512x128xi32>
    %37 = arith.cmpi slt, %35, %36 : vector<512x128xi32>
    %cst_11 = arith.constant 0.000000e+00 : f32
    %38 = vector.broadcast %cst_11 : f32 to vector<512x128xf32>
    %39 = arith.select %37, %31, %38 : vector<512x128xi1>, vector<512x128xf32>
    %40 = vector.shape_cast %39 : vector<512x128xf32> to vector<64x8x128xf32>
    %cst_12 = arith.constant dense<0.000000e+00> : vector<8x128xf32>
    %41 = vector.multi_reduction <add>, %40, %cst_12 [0] : vector<64x8x128xf32> to vector<8x128xf32>
    %42 = arith.addf %24, %41 : vector<8x128xf32>
    %c2_i32 = arith.constant 2 : i32
    %c0_13 = arith.constant 0 : index
    %c0_14 = arith.constant 0 : index
    %c0_15 = arith.constant 0 : index
    %43 = vector.load %arg4[%c0_13, %c0_14, %c0_15] : memref<1x8x128xf32, #tpu.memory_space<vmem>>, vector<1x8x128xf32>
    %44 = vector.shape_cast %43 : vector<1x8x128xf32> to vector<8x128xf32>
    %45 = arith.addf %44, %42 : vector<8x128xf32>
    %c0_16 = arith.constant 0 : index
    %c0_17 = arith.constant 0 : index
    %c0_18 = arith.constant 0 : index
    %46 = vector.load %arg4[%c0_16, %c0_17, %c0_18] : memref<1x8x128xf32, #tpu.memory_space<vmem>>, vector<1x8x128xf32>
    %47 = vector.shape_cast %46 : vector<1x8x128xf32> to vector<8x128xf32>
    %48 = vector.shape_cast %45 : vector<8x128xf32> to vector<1x8x128xf32>
    tpu.vector_store %arg4[%c0_16, %c0_17, %c0_18], %48 {strides = array<i32>} : memref<1x8x128xf32, #tpu.memory_space<vmem>>, vector<1x8x128xf32>,
    return
  }
  func.func @transform_0(%arg0: i32, %arg1: i32) -> (i32, i32) {
    %c1_i32 = arith.constant 1 : i32
    %0 = arith.muli %arg0, %c1_i32 : i32
    %1 = arith.addi %0, %arg1 : i32
    %c0_i32 = arith.constant 0 : i32
    %2 = arith.minsi %1, %c0_i32 : i32
    %c0_i32_0 = arith.constant 0 : i32
    %c0_i32_1 = arith.constant 0 : i32
    return %2, %c0_i32_0 : i32, i32
  }
  func.func @transform_1(%arg0: i32, %arg1: i32) -> (i32, i32) {
    %c1_i32 = arith.constant 1 : i32
    %0 = arith.muli %arg0, %c1_i32 : i32
    %1 = arith.addi %0, %arg1 : i32
    %c0_i32 = arith.constant 0 : i32
    %2 = arith.minsi %1, %c0_i32 : i32
    %c0_i32_0 = arith.constant 0 : i32
    %c0_i32_1 = arith.constant 0 : i32
    return %2, %c0_i32_0 : i32, i32
  }
  func.func @transform_2(%arg0: i32, %arg1: i32) -> (i32, i32, i32) {
    %c0_i32 = arith.constant 0 : i32
    %c0_i32_0 = arith.constant 0 : i32
    %c0_i32_1 = arith.constant 0 : i32
    return %arg0, %c0_i32, %c0_i32_0 : i32, i32, i32
  }
}

</mosaic_0001>

<llo_original>
// kernel: tpu_custom_call.1
$region0: #{tpu_custom_call.1}
  #allocation0 [shape = 'u32[]', space=smem, size = 0x4, offset = 0x4, fixed_abs, tag = 'smem constant byte address 0x4 - core index']
  #allocation1 [shape = 'u32[144,128]{1,0:T(1,128)}', space=vmem, size = 0x12000, scoped, tag = 'internal scratch']
  %s0 = inlined_call_operand.hbm [shape: f32[1024,128], index: 0, kind: input, shape index: {}]
  %s1 = inlined_call_operand.hbm [shape: f32[1024,128], index: 1, kind: input, shape index: {}]
  %s2 = inlined_call_operand.hbm [shape: f32[1,8,128], index: 2, kind: output, shape index: {}]
  %s3 = sld [smem:[#allocation0]]
  $region30: #{tpu_custom_call.1} parent=0
    _
  %s5 = ssub.s32 1, %s3
  %s6 = scalar_select 0, %s5, %s3
  $region1: #{tpu_custom_call.1} parent=0
    #allocation2 [shape = 'u8[524288]{0}', space=vmem, size = 0x80000, scoped, tag = 'input window, operand 0, single buffered']
    #allocation3 [shape = 's32[1]{0}', space=sflag, size = 0x4, scoped, tag = 'scoped memory for tpu_custom_call.1']
    #allocation4 [shape = 's32[1]{0}', space=sflag, size = 0x4, scoped, tag = 'scoped memory for tpu_custom_call.1']
    #allocation5 [shape = 'u8[524288]{0}', space=vmem, size = 0x80000, scoped, tag = 'input window, operand 1, single buffered']
    #allocation6 [shape = 's32[1]{0}', space=sflag, size = 0x4, scoped, tag = 'scoped memory for tpu_custom_call.1']
    #allocation7 [shape = 'u8[4096]{0}', space=vmem, size = 0x1000, scoped, tag = 'output window, operand 0, single buffered']
    %7 = vsyncpa [#allocation3], 0
    %8 = vsyncpa [#allocation6], 0
    %9 = vsyncpa [#allocation4], 0
    // Predicated region
    $region2: #{tpu_custom_call.1} parent=1 // pred_check
      _
    $region3: #{tpu_custom_call.1} parent=1 // pred_check_branch
      %11 = sbr.rel (0) target = $region5
    $region4: #{tpu_custom_call.1} parent=1 // pred_region
      %s12 = sadd.s32 0, 0
      %p13 = scmp.lt.s32.totalorder %s12, 0
      %s14 = scalar_select %p13, %s12, 0
      %s15 = smul.u32 128, %s14
      %s17 = ssub.s32 16384, 16384
      %18 = vsyncadd [#allocation3], %s17
      %s19 = smul.addr %s15, 128
      %s20 = scalar_lea.hbm %s0, %s19
      %s21 = sshll.u32 [#allocation2], 4
      %s22 = int_to_ptr.vmem [resolvable:$true] %s21
      %27 = dma.hbm_to_vmem [thread:$0]  %s20, 16384, %s22, [#allocation3], 128, 128, 8
    $region5: #{tpu_custom_call.1} parent=1 // pred_fallthru
      _
    // Predicated region
    $region6: #{tpu_custom_call.1} parent=1 // pred_check
      _
    $region7: #{tpu_custom_call.1} parent=1 // pred_check_branch
      %29 = sbr.rel (0) target = $region9
    $region8: #{tpu_custom_call.1} parent=1 // pred_region
      %s30 = sadd.s32 0, 0
      %p31 = scmp.lt.s32.totalorder %s30, 0
      %s32 = scalar_select %p31, %s30, 0
      %s33 = smul.u32 128, %s32
      %s35 = ssub.s32 16384, 16384
      %36 = vsyncadd [#allocation6], %s35
      %s37 = smul.addr %s33, 128
      %s38 = scalar_lea.hbm %s1, %s37
      %s39 = sshll.u32 [#allocation5], 4
      %s40 = int_to_ptr.vmem [resolvable:$true] %s39
      %45 = dma.hbm_to_vmem [thread:$0]  %s38, 16384, %s40, [#allocation6], 128, 128, 8
    $region9: #{tpu_custom_call.1} parent=1 // pred_fallthru
      _
    // Predicated region
    $region10: #{tpu_custom_call.1} parent=1 // pred_check
      _
    $region11: #{tpu_custom_call.1} parent=1 // pred_check_branch
      %47 = sbr.rel (0) target = $region13
    $region12: #{tpu_custom_call.1} parent=1 // pred_region
      %48 = dma.done [#allocation3], 16384
    $region13: #{tpu_custom_call.1} parent=1 // pred_fallthru
      _
    // Predicated region
    $region14: #{tpu_custom_call.1} parent=1 // pred_check
      _
    $region15: #{tpu_custom_call.1} parent=1 // pred_check_branch
      %50 = sbr.rel (0) target = $region17
    $region16: #{tpu_custom_call.1} parent=1 // pred_region
      %51 = dma.done [#allocation6], 16384
    $region17: #{tpu_custom_call.1} parent=1 // pred_fallthru
      _
    %s52 = sadd.s32 0, 0
    %p53 = scmp.lt.s32.totalorder %s52, 0
    %s54 = scalar_select %p53, %s52, 0
    %s55 = smul.u32 128, %s54
    %s56 = sadd.s32 0, 0
    %p57 = scmp.lt.s32.totalorder %s56, 0
    %s58 = scalar_select %p57, %s56, 0
    %s59 = smul.u32 128, %s58
    %p60 = scmp.eq.s32.totalorder 0, 0
    // Predicated region
    $region18: #{tpu_custom_call.1} parent=1 // pred_check
      %p61 = pneg %p60
    $region19: #{tpu_custom_call.1} parent=1 // pred_check_branch
      %63 = sbr.rel (%p61) target = $region21
    $region20: #{tpu_custom_call.1} parent=1 // pred_region
      %64 = vst [vmem:[#allocation7] sm:$0xff] 0.0
    $region21: #{tpu_custom_call.1} parent=1 // pred_fallthru
      _
    %s65 = sadd.s32 0, 0
    %s66 = smul.u32 %s65, 1024
    %v67 = vld [vmem:[#allocation2] sm:$0xff]
    %v68 = vld [vmem:[#allocation2 + $0x8] sm:$0xff]
    %v69 = vld [vmem:[#allocation2 + $0x10] sm:$0xff]
    %v70 = vld [vmem:[#allocation2 + $0x18] sm:$0xff]
    %v71 = vld [vmem:[#allocation2 + $0x20] sm:$0xff]
    %v72 = vld [vmem:[#allocation2 + $0x28] sm:$0xff]
    %v73 = vld [vmem:[#allocation2 + $0x30] sm:$0xff]
    %v74 = vld [vmem:[#allocation2 + $0x38] sm:$0xff]
    %v75 = vld [vmem:[#allocation2 + $0x40] sm:$0xff]
    %v76 = vld [vmem:[#allocation2 + $0x48] sm:$0xff]
    %v77 = vld [vmem:[#allocation2 + $0x50] sm:$0xff]
    %v78 = vld [vmem:[#allocation2 + $0x58] sm:$0xff]
    %v79 = vld [vmem:[#allocation2 + $0x60] sm:$0xff]
    %v80 = vld [vmem:[#allocation2 + $0x68] sm:$0xff]
    %v81 = vld [vmem:[#allocation2 + $0x70] sm:$0xff]
    %v82 = vld [vmem:[#allocation2 + $0x78] sm:$0xff]
    %v83 = vld [vmem:[#allocation2 + $0x80] sm:$0xff]
    %v84 = vld [vmem:[#allocation2 + $0x88] sm:$0xff]
    %v85 = vld [vmem:[#allocation2 + $0x90] sm:$0xff]
    %v86 = vld [vmem:[#allocation2 + $0x98] sm:$0xff]
    %v87 = vld [vmem:[#allocation2 + $0xa0] sm:$0xff]
    %v88 = vld [vmem:[#allocation2 + $0xa8] sm:$0xff]
    %v89 = vld [vmem:[#allocation2 + $0xb0] sm:$0xff]
    %v90 = vld [vmem:[#allocation2 + $0xb8] sm:$0xff]
    %v91 = vld [vmem:[#allocation2 + $0xc0] sm:$0xff]
    %v92 = vld [vmem:[#allocation2 + $0xc8] sm:$0xff]
    %v93 = vld [vmem:[#allocation2 + $0xd0] sm:$0xff]
    %v94 = vld [vmem:[#allocation2 + $0xd8] sm:$0xff]
    %v95 = vld [vmem:[#allocation2 + $0xe0] sm:$0xff]
    %v96 = vld [vmem:[#allocation2 + $0xe8] sm:$0xff]
    %v97 = vld [vmem:[#allocation2 + $0xf0] sm:$0xff]
    %v98 = vld [vmem:[#allocation2 + $0xf8] sm:$0xff]
    %v99 = vld [vmem:[#allocation2 + $0x100] sm:$0xff]
    %v100 = vld [vmem:[#allocation2 + $0x108] sm:$0xff]
    %v101 = vld [vmem:[#allocation2 + $0x110] sm:$0xff]
    %v102 = vld [vmem:[#allocation2 + $0x118] sm:$0xff]
    %v103 = vld [vmem:[#allocation2 + $0x120] sm:$0xff]
    %v104 = vld [vmem:[#allocation2 + $0x128] sm:$0xff]
    %v105 = vld [vmem:[#allocation2 + $0x130] sm:$0xff]
    %v106 = vld [vmem:[#allocation2 + $0x138] sm:$0xff]
    %v107 = vld [vmem:[#allocation2 + $0x140] sm:$0xff]
    %v108 = vld [vmem:[#allocation2 + $0x148] sm:$0xff]
    %v109 = vld [vmem:[#allocation2 + $0x150] sm:$0xff]
    %v110 = vld [vmem:[#allocation2 + $0x158] sm:$0xff]
    %v111 = vld [vmem:[#allocation2 + $0x160] sm:$0xff]
    %v112 = vld [vmem:[#allocation2 + $0x168] sm:$0xff]
    %v113 = vld [vmem:[#allocation2 + $0x170] sm:$0xff]
    %v114 = vld [vmem:[#allocation2 + $0x178] sm:$0xff]
    %v115 = vld [vmem:[#allocation2 + $0x180] sm:$0xff]
    %v116 = vld [vmem:[#allocation2 + $0x188] sm:$0xff]
    %v117 = vld [vmem:[#allocation2 + $0x190] sm:$0xff]
    %v118 = vld [vmem:[#allocation2 + $0x198] sm:$0xff]
    %v119 = vld [vmem:[#allocation2 + $0x1a0] sm:$0xff]
    %v120 = vld [vmem:[#allocation2 + $0x1a8] sm:$0xff]
    %v121 = vld [vmem:[#allocation2 + $0x1b0] sm:$0xff]
    %v122 = vld [vmem:[#allocation2 + $0x1b8] sm:$0xff]
    %v123 = vld [vmem:[#allocation2 + $0x1c0] sm:$0xff]
    %v124 = vld [vmem:[#allocation2 + $0x1c8] sm:$0xff]
    %v125 = vld [vmem:[#allocation2 + $0x1d0] sm:$0xff]
    %v126 = vld [vmem:[#allocation2 + $0x1d8] sm:$0xff]
    %v127 = vld [vmem:[#allocation2 + $0x1e0] sm:$0xff]
    %v128 = vld [vmem:[#allocation2 + $0x1e8] sm:$0xff]
    %v129 = vld [vmem:[#allocation2 + $0x1f0] sm:$0xff]
    %v130 = vld [vmem:[#allocation2 + $0x1f8] sm:$0xff]
    %v131 = vld [vmem:[#allocation5] sm:$0xff]
    %v132 = vld [vmem:[#allocation5 + $0x8] sm:$0xff]
    %v133 = vld [vmem:[#allocation5 + $0x10] sm:$0xff]
    %v134 = vld [vmem:[#allocation5 + $0x18] sm:$0xff]
    %v135 = vld [vmem:[#allocation5 + $0x20] sm:$0xff]
    %v136 = vld [vmem:[#allocation5 + $0x28] sm:$0xff]
    %v137 = vld [vmem:[#allocation5 + $0x30] sm:$0xff]
    %v138 = vld [vmem:[#allocation5 + $0x38] sm:$0xff]
    %v139 = vld [vmem:[#allocation5 + $0x40] sm:$0xff]
    %v140 = vld [vmem:[#allocation5 + $0x48] sm:$0xff]
    %v141 = vld [vmem:[#allocation5 + $0x50] sm:$0xff]
    %v142 = vld [vmem:[#allocation5 + $0x58] sm:$0xff]
    %v143 = vld [vmem:[#allocation5 + $0x60] sm:$0xff]
    %v144 = vld [vmem:[#allocation5 + $0x68] sm:$0xff]
    %v145 = vld [vmem:[#allocation5 + $0x70] sm:$0xff]
    %v146 = vld [vmem:[#allocation5 + $0x78] sm:$0xff]
    %v147 = vld [vmem:[#allocation5 + $0x80] sm:$0xff]
    %v148 = vld [vmem:[#allocation5 + $0x88] sm:$0xff]
    %v149 = vld [vmem:[#allocation5 + $0x90] sm:$0xff]
    %v150 = vld [vmem:[#allocation5 + $0x98] sm:$0xff]
    %v151 = vld [vmem:[#allocation5 + $0xa0] sm:$0xff]
    %v152 = vld [vmem:[#allocation5 + $0xa8] sm:$0xff]
    %v153 = vld [vmem:[#allocation5 + $0xb0] sm:$0xff]
    %v154 = vld [vmem:[#allocation5 + $0xb8] sm:$0xff]
    %v155 = vld [vmem:[#allocation5 + $0xc0] sm:$0xff]
    %v156 = vld [vmem:[#allocation5 + $0xc8] sm:$0xff]
    %v157 = vld [vmem:[#allocation5 + $0xd0] sm:$0xff]
    %v158 = vld [vmem:[#allocation5 + $0xd8] sm:$0xff]
    %v159 = vld [vmem:[#allocation5 + $0xe0] sm:$0xff]
    %v160 = vld [vmem:[#allocation5 + $0xe8] sm:$0xff]
    %v161 = vld [vmem:[#allocation5 + $0xf0] sm:$0xff]
    %v162 = vld [vmem:[#allocation5 + $0xf8] sm:$0xff]
    %v163 = vld [vmem:[#allocation5 + $0x100] sm:$0xff]
    %v164 = vld [vmem:[#allocation5 + $0x108] sm:$0xff]
    %v165 = vld [vmem:[#allocation5 + $0x110] sm:$0xff]
    %v166 = vld [vmem:[#allocation5 + $0x118] sm:$0xff]
    %v167 = vld [vmem:[#allocation5 + $0x120] sm:$0xff]
    %v168 = vld [vmem:[#allocation5 + $0x128] sm:$0xff]
    %v169 = vld [vmem:[#allocation5 + $0x130] sm:$0xff]
    %v170 = vld [vmem:[#allocation5 + $0x138] sm:$0xff]
    %v171 = vld [vmem:[#allocation5 + $0x140] sm:$0xff]
    %v172 = vld [vmem:[#allocation5 + $0x148] sm:$0xff]
    %v173 = vld [vmem:[#allocation5 + $0x150] sm:$0xff]
    %v174 = vld [vmem:[#allocation5 + $0x158] sm:$0xff]
    %v175 = vld [vmem:[#allocation5 + $0x160] sm:$0xff]
    %v176 = vld [vmem:[#allocation5 + $0x168] sm:$0xff]
    %v177 = vld [vmem:[#allocation5 + $0x170] sm:$0xff]
    %v178 = vld [vmem:[#allocation5 + $0x178] sm:$0xff]
    %v179 = vld [vmem:[#allocation5 + $0x180] sm:$0xff]
    %v180 = vld [vmem:[#allocation5 + $0x188] sm:$0xff]
    %v181 = vld [vmem:[#allocation5 + $0x190] sm:$0xff]
    %v182 = vld [vmem:[#allocation5 + $0x198] sm:$0xff]
    %v183 = vld [vmem:[#allocation5 + $0x1a0] sm:$0xff]
    %v184 = vld [vmem:[#allocation5 + $0x1a8] sm:$0xff]
    %v185 = vld [vmem:[#allocation5 + $0x1b0] sm:$0xff]
    %v186 = vld [vmem:[#allocation5 + $0x1b8] sm:$0xff]
    %v187 = vld [vmem:[#allocation5 + $0x1c0] sm:$0xff]
    %v188 = vld [vmem:[#allocation5 + $0x1c8] sm:$0xff]
    %v189 = vld [vmem:[#allocation5 + $0x1d0] sm:$0xff]
    %v190 = vld [vmem:[#allocation5 + $0x1d8] sm:$0xff]
    %v191 = vld [vmem:[#allocation5 + $0x1e0] sm:$0xff]
    %v192 = vld [vmem:[#allocation5 + $0x1e8] sm:$0xff]
    %v193 = vld [vmem:[#allocation5 + $0x1f0] sm:$0xff]
    %v194 = vld [vmem:[#allocation5 + $0x1f8] sm:$0xff]
    %v195 = vsub.f32 %v67, %v131
    %v196 = vsub.f32 %v68, %v132
    %v197 = vsub.f32 %v69, %v133
    %v198 = vsub.f32 %v70, %v134
    %v199 = vsub.f32 %v71, %v135
    %v200 = vsub.f32 %v72, %v136
    %v201 = vsub.f32 %v73, %v137
    %v202 = vsub.f32 %v74, %v138
    %v203 = vsub.f32 %v75, %v139
    %v204 = vsub.f32 %v76, %v140
    %v205 = vsub.f32 %v77, %v141
    %v206 = vsub.f32 %v78, %v142
    %v207 = vsub.f32 %v79, %v143
    %v208 = vsub.f32 %v80, %v144
    %v209 = vsub.f32 %v81, %v145
    %v210 = vsub.f32 %v82, %v146
    %v211 = vsub.f32 %v83, %v147
    %v212 = vsub.f32 %v84, %v148
    %v213 = vsub.f32 %v85, %v149
    %v214 = vsub.f32 %v86, %v150
    %v215 = vsub.f32 %v87, %v151
    %v216 = vsub.f32 %v88, %v152
    %v217 = vsub.f32 %v89, %v153
    %v218 = vsub.f32 %v90, %v154
    %v219 = vsub.f32 %v91, %v155
    %v220 = vsub.f32 %v92, %v156
    %v221 = vsub.f32 %v93, %v157
    %v222 = vsub.f32 %v94, %v158
    %v223 = vsub.f32 %v95, %v159
    %v224 = vsub.f32 %v96, %v160
    %v225 = vsub.f32 %v97, %v161
    %v226 = vsub.f32 %v98, %v162
    %v227 = vsub.f32 %v99, %v163
    %v228 = vsub.f32 %v100, %v164
    %v229 = vsub.f32 %v101, %v165
    %v230 = vsub.f32 %v102, %v166
    %v231 = vsub.f32 %v103, %v167
    %v232 = vsub.f32 %v104, %v168
    %v233 = vsub.f32 %v105, %v169
    %v234 = vsub.f32 %v106, %v170
    %v235 = vsub.f32 %v107, %v171
    %v236 = vsub.f32 %v108, %v172
    %v237 = vsub.f32 %v109, %v173
    %v238 = vsub.f32 %v110, %v174
    %v239 = vsub.f32 %v111, %v175
    %v240 = vsub.f32 %v112, %v176
    %v241 = vsub.f32 %v113, %v177
    %v242 = vsub.f32 %v114, %v178
    %v243 = vsub.f32 %v115, %v179
    %v244 = vsub.f32 %v116, %v180
    %v245 = vsub.f32 %v117, %v181
    %v246 = vsub.f32 %v118, %v182
    %v247 = vsub.f32 %v119, %v183
    %v248 = vsub.f32 %v120, %v184
    %v249 = vsub.f32 %v121, %v185
    %v250 = vsub.f32 %v122, %v186
    %v251 = vsub.f32 %v123, %v187
    %v252 = vsub.f32 %v124, %v188
    %v253 = vsub.f32 %v125, %v189
    %v254 = vsub.f32 %v126, %v190
    %v255 = vsub.f32 %v127, %v191
    %v256 = vsub.f32 %v128, %v192
    %v257 = vsub.f32 %v129, %v193
    %v258 = vsub.f32 %v130, %v194
    %v259 = vmul.f32 %v195, %v195
    %v260 = vmul.f32 %v196, %v196
    %v261 = vmul.f32 %v197, %v197
    %v262 = vmul.f32 %v198, %v198
    %v263 = vmul.f32 %v199, %v199
    %v264 = vmul.f32 %v200, %v200
    %v265 = vmul.f32 %v201, %v201
    %v266 = vmul.f32 %v202, %v202
    %v267 = vmul.f32 %v203, %v203
    %v268 = vmul.f32 %v204, %v204
    %v269 = vmul.f32 %v205, %v205
    %v270 = vmul.f32 %v206, %v206
    %v271 = vmul.f32 %v207, %v207
    %v272 = vmul.f32 %v208, %v208
    %v273 = vmul.f32 %v209, %v209
    %v274 = vmul.f32 %v210, %v210
    %v275 = vmul.f32 %v211, %v211
    %v276 = vmul.f32 %v212, %v212
    %v277 = vmul.f32 %v213, %v213
    %v278 = vmul.f32 %v214, %v214
    %v279 = vmul.f32 %v215, %v215
    %v280 = vmul.f32 %v216, %v216
    %v281 = vmul.f32 %v217, %v217
    %v282 = vmul.f32 %v218, %v218
    %v283 = vmul.f32 %v219, %v219
    %v284 = vmul.f32 %v220, %v220
    %v285 = vmul.f32 %v221, %v221
    %v286 = vmul.f32 %v222, %v222
    %v287 = vmul.f32 %v223, %v223
    %v288 = vmul.f32 %v224, %v224
    %v289 = vmul.f32 %v225, %v225
    %v290 = vmul.f32 %v226, %v226
    %v291 = vmul.f32 %v227, %v227
    %v292 = vmul.f32 %v228, %v228
    %v293 = vmul.f32 %v229, %v229
    %v294 = vmul.f32 %v230, %v230
    %v295 = vmul.f32 %v231, %v231
    %v296 = vmul.f32 %v232, %v232
    %v297 = vmul.f32 %v233, %v233
    %v298 = vmul.f32 %v234, %v234
    %v299 = vmul.f32 %v235, %v235
    %v300 = vmul.f32 %v236, %v236
    %v301 = vmul.f32 %v237, %v237
    %v302 = vmul.f32 %v238, %v238
    %v303 = vmul.f32 %v239, %v239
    %v304 = vmul.f32 %v240, %v240
    %v305 = vmul.f32 %v241, %v241
    %v306 = vmul.f32 %v242, %v242
    %v307 = vmul.f32 %v243, %v243
    %v308 = vmul.f32 %v244, %v244
    %v309 = vmul.f32 %v245, %v245
    %v310 = vmul.f32 %v246, %v246
    %v311 = vmul.f32 %v247, %v247
    %v312 = vmul.f32 %v248, %v248
    %v313 = vmul.f32 %v249, %v249
    %v314 = vmul.f32 %v250, %v250
    %v315 = vmul.f32 %v251, %v251
    %v316 = vmul.f32 %v252, %v252
    %v317 = vmul.f32 %v253, %v253
    %v318 = vmul.f32 %v254, %v254
    %v319 = vmul.f32 %v255, %v255
    %v320 = vmul.f32 %v256, %v256
    %v321 = vmul.f32 %v257, %v257
    %v322 = vmul.f32 %v258, %v258
    %v323 = vlaneseq
    %v324 = vshrl.u32 %v323, 7
    %v325 = vadd.s32 %v324, 8
    %v326 = vadd.s32 %v324, 16
    %v327 = vadd.s32 %v324, 24
    %v328 = vadd.s32 %v324, 32
    %v329 = vadd.s32 %v324, 40
    %v330 = vadd.s32 %v324, 48
    %v331 = vadd.s32 %v324, 56
    %v332 = vadd.s32 %v324, 64
    %v333 = vadd.s32 %v324, 72
    %v334 = vadd.s32 %v324, 80
    %v335 = vadd.s32 %v324, 88
    %v336 = vadd.s32 %v324, 96
    %v337 = vadd.s32 %v324, 104
    %v338 = vadd.s32 %v324, 112
    %v339 = vadd.s32 %v324, 120
    %v340 = vadd.s32 %v324, 128
    %v341 = vadd.s32 %v324, 136
    %v342 = vadd.s32 %v324, 144
    %v343 = vadd.s32 %v324, 152
    %v344 = vadd.s32 %v324, 160
    %v345 = vadd.s32 %v324, 168
    %v346 = vadd.s32 %v324, 176
    %v347 = vadd.s32 %v324, 184
    %v348 = vadd.s32 %v324, 192
    %v349 = vadd.s32 %v324, 200
    %v350 = vadd.s32 %v324, 208
    %v351 = vadd.s32 %v324, 216
    %v352 = vadd.s32 %v324, 224
    %v353 = vadd.s32 %v324, 232
    %v354 = vadd.s32 %v324, 240
    %v355 = vadd.s32 %v324, 248
    %v356 = vadd.s32 %v324, 256
    %v357 = vadd.s32 %v324, 264
    %v358 = vadd.s32 %v324, 272
    %v359 = vadd.s32 %v324, 280
    %v360 = vadd.s32 %v324, 288
    %v361 = vadd.s32 %v324, 296
    %v362 = vadd.s32 %v324, 304
    %v363 = vadd.s32 %v324, 312
    %v364 = vadd.s32 %v324, 320
    %v365 = vadd.s32 %v324, 328
    %v366 = vadd.s32 %v324, 336
    %v367 = vadd.s32 %v324, 344
    %v368 = vadd.s32 %v324, 352
    %v369 = vadd.s32 %v324, 360
    %v370 = vadd.s32 %v324, 368
    %v371 = vadd.s32 %v324, 376
    %v372 = vadd.s32 %v324, 384
    %v373 = vadd.s32 %v324, 392
    %v374 = vadd.s32 %v324, 400
    %v375 = vadd.s32 %v324, 408
    %v376 = vadd.s32 %v324, 416
    %v377 = vadd.s32 %v324, 424
    %v378 = vadd.s32 %v324, 432
    %v379 = vadd.s32 %v324, 440
    %v380 = vadd.s32 %v324, 448
    %v381 = vadd.s32 %v324, 456
    %v382 = vadd.s32 %v324, 464
    %v383 = vadd.s32 %v324, 472
    %v384 = vadd.s32 %v324, 480
    %v385 = vadd.s32 %v324, 488
    %v386 = vadd.s32 %v324, 496
    %v387 = vadd.s32 %v324, 504
    %v388 = vstv %s66
    %v389 = vadd.s32 %v388, %v324
    %v390 = vadd.s32 %v388, %v325
    %v391 = vadd.s32 %v388, %v326
    %v392 = vadd.s32 %v388, %v327
    %v393 = vadd.s32 %v388, %v328
    %v394 = vadd.s32 %v388, %v329
    %v395 = vadd.s32 %v388, %v330
    %v396 = vadd.s32 %v388, %v331
    %v397 = vadd.s32 %v388, %v332
    %v398 = vadd.s32 %v388, %v333
    %v399 = vadd.s32 %v388, %v334
    %v400 = vadd.s32 %v388, %v335
    %v401 = vadd.s32 %v388, %v336
    %v402 = vadd.s32 %v388, %v337
    %v403 = vadd.s32 %v388, %v338
    %v404 = vadd.s32 %v388, %v339
    %v405 = vadd.s32 %v388, %v340
    %v406 = vadd.s32 %v388, %v341
    %v407 = vadd.s32 %v388, %v342
    %v408 = vadd.s32 %v388, %v343
    %v409 = vadd.s32 %v388, %v344
    %v410 = vadd.s32 %v388, %v345
    %v411 = vadd.s32 %v388, %v346
    %v412 = vadd.s32 %v388, %v347
    %v413 = vadd.s32 %v388, %v348
    %v414 = vadd.s32 %v388, %v349
    %v415 = vadd.s32 %v388, %v350
    %v416 = vadd.s32 %v388, %v351
    %v417 = vadd.s32 %v388, %v352
    %v418 = vadd.s32 %v388, %v353
    %v419 = vadd.s32 %v388, %v354
    %v420 = vadd.s32 %v388, %v355
    %v421 = vadd.s32 %v388, %v356
    %v422 = vadd.s32 %v388, %v357
    %v423 = vadd.s32 %v388, %v358
    %v424 = vadd.s32 %v388, %v359
    %v425 = vadd.s32 %v388, %v360
    %v426 = vadd.s32 %v388, %v361
    %v427 = vadd.s32 %v388, %v362
    %v428 = vadd.s32 %v388, %v363
    %v429 = vadd.s32 %v388, %v364
    %v430 = vadd.s32 %v388, %v365
    %v431 = vadd.s32 %v388, %v366
    %v432 = vadd.s32 %v388, %v367
    %v433 = vadd.s32 %v388, %v368
    %v434 = vadd.s32 %v388, %v369
    %v435 = vadd.s32 %v388, %v370
    %v436 = vadd.s32 %v388, %v371
    %v437 = vadd.s32 %v388, %v372
    %v438 = vadd.s32 %v388, %v373
    %v439 = vadd.s32 %v388, %v374
    %v440 = vadd.s32 %v388, %v375
    %v441 = vadd.s32 %v388, %v376
    %v442 = vadd.s32 %v388, %v377
    %v443 = vadd.s32 %v388, %v378
    %v444 = vadd.s32 %v388, %v379
    %v445 = vadd.s32 %v388, %v380
    %v446 = vadd.s32 %v388, %v381
    %v447 = vadd.s32 %v388, %v382
    %v448 = vadd.s32 %v388, %v383
    %v449 = vadd.s32 %v388, %v384
    %v450 = vadd.s32 %v388, %v385
    %v451 = vadd.s32 %v388, %v386
    %v452 = vadd.s32 %v388, %v387
    %vm453 = vcmp.lt.s32.totalorder %v389, 1024
    %vm454 = vcmp.lt.s32.totalorder %v390, 1024
    %vm455 = vcmp.lt.s32.totalorder %v391, 1024
    %vm456 = vcmp.lt.s32.totalorder %v392, 1024
    %vm457 = vcmp.lt.s32.totalorder %v393, 1024
    %vm458 = vcmp.lt.s32.totalorder %v394, 1024
    %vm459 = vcmp.lt.s32.totalorder %v395, 1024
    %vm460 = vcmp.lt.s32.totalorder %v396, 1024
    %vm461 = vcmp.lt.s32.totalorder %v397, 1024
    %vm462 = vcmp.lt.s32.totalorder %v398, 1024
    %vm463 = vcmp.lt.s32.totalorder %v399, 1024
    %vm464 = vcmp.lt.s32.totalorder %v400, 1024
    %vm465 = vcmp.lt.s32.totalorder %v401, 1024
    %vm466 = vcmp.lt.s32.totalorder %v402, 1024
    %vm467 = vcmp.lt.s32.totalorder %v403, 1024
    %vm468 = vcmp.lt.s32.totalorder %v404, 1024
    %vm469 = vcmp.lt.s32.totalorder %v405, 1024
    %vm470 = vcmp.lt.s32.totalorder %v406, 1024
    %vm471 = vcmp.lt.s32.totalorder %v407, 1024
    %vm472 = vcmp.lt.s32.totalorder %v408, 1024
    %vm473 = vcmp.lt.s32.totalorder %v409, 1024
    %vm474 = vcmp.lt.s32.totalorder %v410, 1024
    %vm475 = vcmp.lt.s32.totalorder %v411, 1024
    %vm476 = vcmp.lt.s32.totalorder %v412, 1024
    %vm477 = vcmp.lt.s32.totalorder %v413, 1024
    %vm478 = vcmp.lt.s32.totalorder %v414, 1024
    %vm479 = vcmp.lt.s32.totalorder %v415, 1024
    %vm480 = vcmp.lt.s32.totalorder %v416, 1024
    %vm481 = vcmp.lt.s32.totalorder %v417, 1024
    %vm482 = vcmp.lt.s32.totalorder %v418, 1024
    %vm483 = vcmp.lt.s32.totalorder %v419, 1024
    %vm484 = vcmp.lt.s32.totalorder %v420, 1024
    %vm485 = vcmp.lt.s32.totalorder %v421, 1024
    %vm486 = vcmp.lt.s32.totalorder %v422, 1024
    %vm487 = vcmp.lt.s32.totalorder %v423, 1024
    %vm488 = vcmp.lt.s32.totalorder %v424, 1024
    %vm489 = vcmp.lt.s32.totalorder %v425, 1024
    %vm490 = vcmp.lt.s32.totalorder %v426, 1024
    %vm491 = vcmp.lt.s32.totalorder %v427, 1024
    %vm492 = vcmp.lt.s32.totalorder %v428, 1024
    %vm493 = vcmp.lt.s32.totalorder %v429, 1024
    %vm494 = vcmp.lt.s32.totalorder %v430, 1024
    %vm495 = vcmp.lt.s32.totalorder %v431, 1024
    %vm496 = vcmp.lt.s32.totalorder %v432, 1024
    %vm497 = vcmp.lt.s32.totalorder %v433, 1024
    %vm498 = vcmp.lt.s32.totalorder %v434, 1024
    %vm499 = vcmp.lt.s32.totalorder %v435, 1024
    %vm500 = vcmp.lt.s32.totalorder %v436, 1024
    %vm501 = vcmp.lt.s32.totalorder %v437, 1024
    %vm502 = vcmp.lt.s32.totalorder %v438, 1024
    %vm503 = vcmp.lt.s32.totalorder %v439, 1024
    %vm504 = vcmp.lt.s32.totalorder %v440, 1024
    %vm505 = vcmp.lt.s32.totalorder %v441, 1024
    %vm506 = vcmp.lt.s32.totalorder %v442, 1024
    %vm507 = vcmp.lt.s32.totalorder %v443, 1024
    %vm508 = vcmp.lt.s32.totalorder %v444, 1024
    %vm509 = vcmp.lt.s32.totalorder %v445, 1024
    %vm510 = vcmp.lt.s32.totalorder %v446, 1024
    %vm511 = vcmp.lt.s32.totalorder %v447, 1024
    %vm512 = vcmp.lt.s32.totalorder %v448, 1024
    %vm513 = vcmp.lt.s32.totalorder %v449, 1024
    %vm514 = vcmp.lt.s32.totalorder %v450, 1024
    %vm515 = vcmp.lt.s32.totalorder %v451, 1024
    %vm516 = vcmp.lt.s32.totalorder %v452, 1024
    %v517 = vsel %vm453, %v259, 0.0
    %v518 = vsel %vm454, %v260, 0.0
    %v519 = vsel %vm455, %v261, 0.0
    %v520 = vsel %vm456, %v262, 0.0
    %v521 = vsel %vm457, %v263, 0.0
    %v522 = vsel %vm458, %v264, 0.0
    %v523 = vsel %vm459, %v265, 0.0
    %v524 = vsel %vm460, %v266, 0.0
    %v525 = vsel %vm461, %v267, 0.0
    %v526 = vsel %vm462, %v268, 0.0
    %v527 = vsel %vm463, %v269, 0.0
    %v528 = vsel %vm464, %v270, 0.0
    %v529 = vsel %vm465, %v271, 0.0
    %v530 = vsel %vm466, %v272, 0.0
    %v531 = vsel %vm467, %v273, 0.0
    %v532 = vsel %vm468, %v274, 0.0
    %v533 = vsel %vm469, %v275, 0.0
    %v534 = vsel %vm470, %v276, 0.0
    %v535 = vsel %vm471, %v277, 0.0
    %v536 = vsel %vm472, %v278, 0.0
    %v537 = vsel %vm473, %v279, 0.0
    %v538 = vsel %vm474, %v280, 0.0
    %v539 = vsel %vm475, %v281, 0.0
    %v540 = vsel %vm476, %v282, 0.0
    %v541 = vsel %vm477, %v283, 0.0
    %v542 = vsel %vm478, %v284, 0.0
    %v543 = vsel %vm479, %v285, 0.0
    %v544 = vsel %vm480, %v286, 0.0
    %v545 = vsel %vm481, %v287, 0.0
    %v546 = vsel %vm482, %v288, 0.0
    %v547 = vsel %vm483, %v289, 0.0
    %v548 = vsel %vm484, %v290, 0.0
    %v549 = vsel %vm485, %v291, 0.0
    %v550 = vsel %vm486, %v292, 0.0
    %v551 = vsel %vm487, %v293, 0.0
    %v552 = vsel %vm488, %v294, 0.0
    %v553 = vsel %vm489, %v295, 0.0
    %v554 = vsel %vm490, %v296, 0.0
    %v555 = vsel %vm491, %v297, 0.0
    %v556 = vsel %vm492, %v298, 0.0
    %v557 = vsel %vm493, %v299, 0.0
    %v558 = vsel %vm494, %v300, 0.0
    %v559 = vsel %vm495, %v301, 0.0
    %v560 = vsel %vm496, %v302, 0.0
    %v561 = vsel %vm497, %v303, 0.0
    %v562 = vsel %vm498, %v304, 0.0
    %v563 = vsel %vm499, %v305, 0.0
    %v564 = vsel %vm500, %v306, 0.0
    %v565 = vsel %vm501, %v307, 0.0
    %v566 = vsel %vm502, %v308, 0.0
    %v567 = vsel %vm503, %v309, 0.0
    %v568 = vsel %vm504, %v310, 0.0
    %v569 = vsel %vm505, %v311, 0.0
    %v570 = vsel %vm506, %v312, 0.0
    %v571 = vsel %vm507, %v313, 0.0
    %v572 = vsel %vm508, %v314, 0.0
    %v573 = vsel %vm509, %v315, 0.0
    %v574 = vsel %vm510, %v316, 0.0
    %v575 = vsel %vm511, %v317, 0.0
    %v576 = vsel %vm512, %v318, 0.0
    %v577 = vsel %vm513, %v319, 0.0
    %v578 = vsel %vm514, %v320, 0.0
    %v579 = vsel %vm515, %v321, 0.0
    %v580 = vsel %vm516, %v322, 0.0
    %v581 = vadd.f32 %v517, %v518
    %v582 = vadd.f32 %v581, %v519
    %v583 = vadd.f32 %v582, %v520
    %v584 = vadd.f32 %v583, %v521
    %v585 = vadd.f32 %v584, %v522
    %v586 = vadd.f32 %v585, %v523
    %v587 = vadd.f32 %v586, %v524
    %v588 = vadd.f32 %v587, %v525
    %v589 = vadd.f32 %v588, %v526
    %v590 = vadd.f32 %v589, %v527
    %v591 = vadd.f32 %v590, %v528
    %v592 = vadd.f32 %v591, %v529
    %v593 = vadd.f32 %v592, %v530
    %v594 = vadd.f32 %v593, %v531
    %v595 = vadd.f32 %v594, %v532
    %v596 = vadd.f32 %v595, %v533
    %v597 = vadd.f32 %v596, %v534
    %v598 = vadd.f32 %v597, %v535
    %v599 = vadd.f32 %v598, %v536
    %v600 = vadd.f32 %v599, %v537
    %v601 = vadd.f32 %v600, %v538
    %v602 = vadd.f32 %v601, %v539
    %v603 = vadd.f32 %v602, %v540
    %v604 = vadd.f32 %v603, %v541
    %v605 = vadd.f32 %v604, %v542
    %v606 = vadd.f32 %v605, %v543
    %v607 = vadd.f32 %v606, %v544
    %v608 = vadd.f32 %v607, %v545
    %v609 = vadd.f32 %v608, %v546
    %v610 = vadd.f32 %v609, %v547
    %v611 = vadd.f32 %v610, %v548
    %v612 = vadd.f32 %v611, %v549
    %v613 = vadd.f32 %v612, %v550
    %v614 = vadd.f32 %v613, %v551
    %v615 = vadd.f32 %v614, %v552
    %v616 = vadd.f32 %v615, %v553
    %v617 = vadd.f32 %v616, %v554
    %v618 = vadd.f32 %v617, %v555
    %v619 = vadd.f32 %v618, %v556
    %v620 = vadd.f32 %v619, %v557
    %v621 = vadd.f32 %v620, %v558
    %v622 = vadd.f32 %v621, %v559
    %v623 = vadd.f32 %v622, %v560
    %v624 = vadd.f32 %v623, %v561
    %v625 = vadd.f32 %v624, %v562
    %v626 = vadd.f32 %v625, %v563
    %v627 = vadd.f32 %v626, %v564
    %v628 = vadd.f32 %v627, %v565
    %v629 = vadd.f32 %v628, %v566
    %v630 = vadd.f32 %v629, %v567
    %v631 = vadd.f32 %v630, %v568
    %v632 = vadd.f32 %v631, %v569
    %v633 = vadd.f32 %v632, %v570
    %v634 = vadd.f32 %v633, %v571
    %v635 = vadd.f32 %v634, %v572
    %v636 = vadd.f32 %v635, %v573
    %v637 = vadd.f32 %v636, %v574
    %v638 = vadd.f32 %v637, %v575
    %v639 = vadd.f32 %v638, %v576
    %v640 = vadd.f32 %v639, %v577
    %v641 = vadd.f32 %v640, %v578
    %v642 = vadd.f32 %v641, %v579
    %v643 = vadd.f32 %v642, %v580
    %v644 = vadd.f32 %v643, 0.0
    %v645 = vld [vmem:[#allocation2 + $0x200] sm:$0xff]
    %v646 = vld [vmem:[#allocation2 + $0x208] sm:$0xff]
    %v647 = vld [vmem:[#allocation2 + $0x210] sm:$0xff]
    %v648 = vld [vmem:[#allocation2 + $0x218] sm:$0xff]
    %v649 = vld [vmem:[#allocation2 + $0x220] sm:$0xff]
    %v650 = vld [vmem:[#allocation2 + $0x228] sm:$0xff]
    %v651 = vld [vmem:[#allocation2 + $0x230] sm:$0xff]
    %v652 = vld [vmem:[#allocation2 + $0x238] sm:$0xff]
    %v653 = vld [vmem:[#allocation2 + $0x240] sm:$0xff]
    %v654 = vld [vmem:[#allocation2 + $0x248] sm:$0xff]
    %v655 = vld [vmem:[#allocation2 + $0x250] sm:$0xff]
    %v656 = vld [vmem:[#allocation2 + $0x258] sm:$0xff]
    %v657 = vld [vmem:[#allocation2 + $0x260] sm:$0xff]
    %v658 = vld [vmem:[#allocation2 + $0x268] sm:$0xff]
    %v659 = vld [vmem:[#allocation2 + $0x270] sm:$0xff]
    %v660 = vld [vmem:[#allocation2 + $0x278] sm:$0xff]
    %v661 = vld [vmem:[#allocation2 + $0x280] sm:$0xff]
    %v662 = vld [vmem:[#allocation2 + $0x288] sm:$0xff]
    %v663 = vld [vmem:[#allocation2 + $0x290] sm:$0xff]
    %v664 = vld [vmem:[#allocation2 + $0x298] sm:$0xff]
    %v665 = vld [vmem:[#allocation2 + $0x2a0] sm:$0xff]
    %v666 = vld [vmem:[#allocation2 + $0x2a8] sm:$0xff]
    %v667 = vld [vmem:[#allocation2 + $0x2b0] sm:$0xff]
    %v668 = vld [vmem:[#allocation2 + $0x2b8] sm:$0xff]
    %v669 = vld [vmem:[#allocation2 + $0x2c0] sm:$0xff]
    %v670 = vld [vmem:[#allocation2 + $0x2c8] sm:$0xff]
    %v671 = vld [vmem:[#allocation2 + $0x2d0] sm:$0xff]
    %v672 = vld [vmem:[#allocation2 + $0x2d8] sm:$0xff]
    %v673 = vld [vmem:[#allocation2 + $0x2e0] sm:$0xff]
    %v674 = vld [vmem:[#allocation2 + $0x2e8] sm:$0xff]
    %v675 = vld [vmem:[#allocation2 + $0x2f0] sm:$0xff]
    %v676 = vld [vmem:[#allocation2 + $0x2f8] sm:$0xff]
    %v677 = vld [vmem:[#allocation2 + $0x300] sm:$0xff]
    %v678 = vld [vmem:[#allocation2 + $0x308] sm:$0xff]
    %v679 = vld [vmem:[#allocation2 + $0x310] sm:$0xff]
    %v680 = vld [vmem:[#allocation2 + $0x318] sm:$0xff]
    %v681 = vld [vmem:[#allocation2 + $0x320] sm:$0xff]
    %v682 = vld [vmem:[#allocation2 + $0x328] sm:$0xff]
    %v683 = vld [vmem:[#allocation2 + $0x330] sm:$0xff]
    %v684 = vld [vmem:[#allocation2 + $0x338] sm:$0xff]
    %v685 = vld [vmem:[#allocation2 + $0x340] sm:$0xff]
    %v686 = vld [vmem:[#allocation2 + $0x348] sm:$0xff]
    %v687 = vld [vmem:[#allocation2 + $0x350] sm:$0xff]
    %v688 = vld [vmem:[#allocation2 + $0x358] sm:$0xff]
    %v689 = vld [vmem:[#allocation2 + $0x360] sm:$0xff]
    %v690 = vld [vmem:[#allocation2 + $0x368] sm:$0xff]
    %v691 = vld [vmem:[#allocation2 + $0x370] sm:$0xff]
    %v692 = vld [vmem:[#allocation2 + $0x378] sm:$0xff]
    %v693 = vld [vmem:[#allocation2 + $0x380] sm:$0xff]
    %v694 = vld [vmem:[#allocation2 + $0x388] sm:$0xff]
    %v695 = vld [vmem:[#allocation2 + $0x390] sm:$0xff]
    %v696 = vld [vmem:[#allocation2 + $0x398] sm:$0xff]
    %v697 = vld [vmem:[#allocation2 + $0x3a0] sm:$0xff]
    %v698 = vld [vmem:[#allocation2 + $0x3a8] sm:$0xff]
    %v699 = vld [vmem:[#allocation2 + $0x3b0] sm:$0xff]
    %v700 = vld [vmem:[#allocation2 + $0x3b8] sm:$0xff]
    %v701 = vld [vmem:[#allocation2 + $0x3c0] sm:$0xff]
    %v702 = vld [vmem:[#allocation2 + $0x3c8] sm:$0xff]
    %v703 = vld [vmem:[#allocation2 + $0x3d0] sm:$0xff]
    %v704 = vld [vmem:[#allocation2 + $0x3d8] sm:$0xff]
    %v705 = vld [vmem:[#allocation2 + $0x3e0] sm:$0xff]
    %v706 = vld [vmem:[#allocation2 + $0x3e8] sm:$0xff]
    %v707 = vld [vmem:[#allocation2 + $0x3f0] sm:$0xff]
    %v708 = vld [vmem:[#allocation2 + $0x3f8] sm:$0xff]
    %v709 = vld [vmem:[#allocation5 + $0x200] sm:$0xff]
    %v710 = vld [vmem:[#allocation5 + $0x208] sm:$0xff]
    %v711 = vld [vmem:[#allocation5 + $0x210] sm:$0xff]
    %v712 = vld [vmem:[#allocation5 + $0x218] sm:$0xff]
    %v713 = vld [vmem:[#allocation5 + $0x220] sm:$0xff]
    %v714 = vld [vmem:[#allocation5 + $0x228] sm:$0xff]
    %v715 = vld [vmem:[#allocation5 + $0x230] sm:$0xff]
    %v716 = vld [vmem:[#allocation5 + $0x238] sm:$0xff]
    %v717 = vld [vmem:[#allocation5 + $0x240] sm:$0xff]
    %v718 = vld [vmem:[#allocation5 + $0x248] sm:$0xff]
    %v719 = vld [vmem:[#allocation5 + $0x250] sm:$0xff]
    %v720 = vld [vmem:[#allocation5 + $0x258] sm:$0xff]
    %v721 = vld [vmem:[#allocation5 + $0x260] sm:$0xff]
    %v722 = vld [vmem:[#allocation5 + $0x268] sm:$0xff]
    %v723 = vld [vmem:[#allocation5 + $0x270] sm:$0xff]
    %v724 = vld [vmem:[#allocation5 + $0x278] sm:$0xff]
    %v725 = vld [vmem:[#allocation5 + $0x280] sm:$0xff]
    %v726 = vld [vmem:[#allocation5 + $0x288] sm:$0xff]
    %v727 = vld [vmem:[#allocation5 + $0x290] sm:$0xff]
    %v728 = vld [vmem:[#allocation5 + $0x298] sm:$0xff]
    %v729 = vld [vmem:[#allocation5 + $0x2a0] sm:$0xff]
    %v730 = vld [vmem:[#allocation5 + $0x2a8] sm:$0xff]
    %v731 = vld [vmem:[#allocation5 + $0x2b0] sm:$0xff]
    %v732 = vld [vmem:[#allocation5 + $0x2b8] sm:$0xff]
    %v733 = vld [vmem:[#allocation5 + $0x2c0] sm:$0xff]
    %v734 = vld [vmem:[#allocation5 + $0x2c8] sm:$0xff]
    %v735 = vld [vmem:[#allocation5 + $0x2d0] sm:$0xff]
    %v736 = vld [vmem:[#allocation5 + $0x2d8] sm:$0xff]
    %v737 = vld [vmem:[#allocation5 + $0x2e0] sm:$0xff]
    %v738 = vld [vmem:[#allocation5 + $0x2e8] sm:$0xff]
    %v739 = vld [vmem:[#allocation5 + $0x2f0] sm:$0xff]
    %v740 = vld [vmem:[#allocation5 + $0x2f8] sm:$0xff]
    %v741 = vld [vmem:[#allocation5 + $0x300] sm:$0xff]
    %v742 = vld [vmem:[#allocation5 + $0x308] sm:$0xff]
    %v743 = vld [vmem:[#allocation5 + $0x310] sm:$0xff]
    %v744 = vld [vmem:[#allocation5 + $0x318] sm:$0xff]
    %v745 = vld [vmem:[#allocation5 + $0x320] sm:$0xff]
    %v746 = vld [vmem:[#allocation5 + $0x328] sm:$0xff]
    %v747 = vld [vmem:[#allocation5 + $0x330] sm:$0xff]
    %v748 = vld [vmem:[#allocation5 + $0x338] sm:$0xff]
    %v749 = vld [vmem:[#allocation5 + $0x340] sm:$0xff]
    %v750 = vld [vmem:[#allocation5 + $0x348] sm:$0xff]
    %v751 = vld [vmem:[#allocation5 + $0x350] sm:$0xff]
    %v752 = vld [vmem:[#allocation5 + $0x358] sm:$0xff]
    %v753 = vld [vmem:[#allocation5 + $0x360] sm:$0xff]
    %v754 = vld [vmem:[#allocation5 + $0x368] sm:$0xff]
    %v755 = vld [vmem:[#allocation5 + $0x370] sm:$0xff]
    %v756 = vld [vmem:[#allocation5 + $0x378] sm:$0xff]
    %v757 = vld [vmem:[#allocation5 + $0x380] sm:$0xff]
    %v758 = vld [vmem:[#allocation5 + $0x388] sm:$0xff]
    %v759 = vld [vmem:[#allocation5 + $0x390] sm:$0xff]
    %v760 = vld [vmem:[#allocation5 + $0x398] sm:$0xff]
    %v761 = vld [vmem:[#allocation5 + $0x3a0] sm:$0xff]
    %v762 = vld [vmem:[#allocation5 + $0x3a8] sm:$0xff]
    %v763 = vld [vmem:[#allocation5 + $0x3b0] sm:$0xff]
    %v764 = vld [vmem:[#allocation5 + $0x3b8] sm:$0xff]
    %v765 = vld [vmem:[#allocation5 + $0x3c0] sm:$0xff]
    %v766 = vld [vmem:[#allocation5 + $0x3c8] sm:$0xff]
    %v767 = vld [vmem:[#allocation5 + $0x3d0] sm:$0xff]
    %v768 = vld [vmem:[#allocation5 + $0x3d8] sm:$0xff]
    %v769 = vld [vmem:[#allocation5 + $0x3e0] sm:$0xff]
    %v770 = vld [vmem:[#allocation5 + $0x3e8] sm:$0xff]
    %v771 = vld [vmem:[#allocation5 + $0x3f0] sm:$0xff]
    %v772 = vld [vmem:[#allocation5 + $0x3f8] sm:$0xff]
    %v773 = vsub.f32 %v645, %v709
    %v774 = vsub.f32 %v646, %v710
    %v775 = vsub.f32 %v647, %v711
    %v776 = vsub.f32 %v648, %v712
    %v777 = vsub.f32 %v649, %v713
    %v778 = vsub.f32 %v650, %v714
    %v779 = vsub.f32 %v651, %v715
    %v780 = vsub.f32 %v652, %v716
    %v781 = vsub.f32 %v653, %v717
    %v782 = vsub.f32 %v654, %v718
    %v783 = vsub.f32 %v655, %v719
    %v784 = vsub.f32 %v656, %v720
    %v785 = vsub.f32 %v657, %v721
    %v786 = vsub.f32 %v658, %v722
    %v787 = vsub.f32 %v659, %v723
    %v788 = vsub.f32 %v660, %v724
    %v789 = vsub.f32 %v661, %v725
    %v790 = vsub.f32 %v662, %v726
    %v791 = vsub.f32 %v663, %v727
    %v792 = vsub.f32 %v664, %v728
    %v793 = vsub.f32 %v665, %v729
    %v794 = vsub.f32 %v666, %v730
    %v795 = vsub.f32 %v667, %v731
    %v796 = vsub.f32 %v668, %v732
    %v797 = vsub.f32 %v669, %v733
    %v798 = vsub.f32 %v670, %v734
    %v799 = vsub.f32 %v671, %v735
    %v800 = vsub.f32 %v672, %v736
    %v801 = vsub.f32 %v673, %v737
    %v802 = vsub.f32 %v674, %v738
    %v803 = vsub.f32 %v675, %v739
    %v804 = vsub.f32 %v676, %v740
    %v805 = vsub.f32 %v677, %v741
    %v806 = vsub.f32 %v678, %v742
    %v807 = vsub.f32 %v679, %v743
    %v808 = vsub.f32 %v680, %v744
    %v809 = vsub.f32 %v681, %v745
    %v810 = vsub.f32 %v682, %v746
    %v811 = vsub.f32 %v683, %v747
    %v812 = vsub.f32 %v684, %v748
    %v813 = vsub.f32 %v685, %v749
    %v814 = vsub.f32 %v686, %v750
    %v815 = vsub.f32 %v687, %v751
    %v816 = vsub.f32 %v688, %v752
    %v817 = vsub.f32 %v689, %v753
    %v818 = vsub.f32 %v690, %v754
    %v819 = vsub.f32 %v691, %v755
    %v820 = vsub.f32 %v692, %v756
    %v821 = vsub.f32 %v693, %v757
    %v822 = vsub.f32 %v694, %v758
    %v823 = vsub.f32 %v695, %v759
    %v824 = vsub.f32 %v696, %v760
    %v825 = vsub.f32 %v697, %v761
    %v826 = vsub.f32 %v698, %v762
    %v827 = vsub.f32 %v699, %v763
    %v828 = vsub.f32 %v700, %v764
    %v829 = vsub.f32 %v701, %v765
    %v830 = vsub.f32 %v702, %v766
    %v831 = vsub.f32 %v703, %v767
    %v832 = vsub.f32 %v704, %v768
    %v833 = vsub.f32 %v705, %v769
    %v834 = vsub.f32 %v706, %v770
    %v835 = vsub.f32 %v707, %v771
    %v836 = vsub.f32 %v708, %v772
    %v837 = vmul.f32 %v773, %v773
    %v838 = vmul.f32 %v774, %v774
    %v839 = vmul.f32 %v775, %v775
    %v840 = vmul.f32 %v776, %v776
    %v841 = vmul.f32 %v777, %v777
    %v842 = vmul.f32 %v778, %v778
    %v843 = vmul.f32 %v779, %v779
    %v844 = vmul.f32 %v780, %v780
    %v845 = vmul.f32 %v781, %v781
    %v846 = vmul.f32 %v782, %v782
    %v847 = vmul.f32 %v783, %v783
    %v848 = vmul.f32 %v784, %v784
    %v849 = vmul.f32 %v785, %v785
    %v850 = vmul.f32 %v786, %v786
    %v851 = vmul.f32 %v787, %v787
    %v852 = vmul.f32 %v788, %v788
    %v853 = vmul.f32 %v789, %v789
    %v854 = vmul.f32 %v790, %v790
    %v855 = vmul.f32 %v791, %v791
    %v856 = vmul.f32 %v792, %v792
    %v857 = vmul.f32 %v793, %v793
    %v858 = vmul.f32 %v794, %v794
    %v859 = vmul.f32 %v795, %v795
    %v860 = vmul.f32 %v796, %v796
    %v861 = vmul.f32 %v797, %v797
    %v862 = vmul.f32 %v798, %v798
    %v863 = vmul.f32 %v799, %v799
    %v864 = vmul.f32 %v800, %v800
    %v865 = vmul.f32 %v801, %v801
    %v866 = vmul.f32 %v802, %v802
    %v867 = vmul.f32 %v803, %v803
    %v868 = vmul.f32 %v804, %v804
    %v869 = vmul.f32 %v805, %v805
    %v870 = vmul.f32 %v806, %v806
    %v871 = vmul.f32 %v807, %v807
    %v872 = vmul.f32 %v808, %v808
    %v873 = vmul.f32 %v809, %v809
    %v874 = vmul.f32 %v810, %v810
    %v875 = vmul.f32 %v811, %v811
    %v876 = vmul.f32 %v812, %v812
    %v877 = vmul.f32 %v813, %v813
    %v878 = vmul.f32 %v814, %v814
    %v879 = vmul.f32 %v815, %v815
    %v880 = vmul.f32 %v816, %v816
    %v881 = vmul.f32 %v817, %v817
    %v882 = vmul.f32 %v818, %v818
    %v883 = vmul.f32 %v819, %v819
    %v884 = vmul.f32 %v820, %v820
    %v885 = vmul.f32 %v821, %v821
    %v886 = vmul.f32 %v822, %v822
    %v887 = vmul.f32 %v823, %v823
    %v888 = vmul.f32 %v824, %v824
    %v889 = vmul.f32 %v825, %v825
    %v890 = vmul.f32 %v826, %v826
    %v891 = vmul.f32 %v827, %v827
    %v892 = vmul.f32 %v828, %v828
    %v893 = vmul.f32 %v829, %v829
    %v894 = vmul.f32 %v830, %v830
    %v895 = vmul.f32 %v831, %v831
    %v896 = vmul.f32 %v832, %v832
    %v897 = vmul.f32 %v833, %v833
    %v898 = vmul.f32 %v834, %v834
    %v899 = vmul.f32 %v835, %v835
    %v900 = vmul.f32 %v836, %v836
    %s901 = sadd.s32 %s66, 512
    %v902 = vstv %s901
    %v903 = vadd.s32 %v902, %v324
    %v904 = vadd.s32 %v902, %v325
    %v905 = vadd.s32 %v902, %v326
    %v906 = vadd.s32 %v902, %v327
    %v907 = vadd.s32 %v902, %v328
    %v908 = vadd.s32 %v902, %v329
    %v909 = vadd.s32 %v902, %v330
    %v910 = vadd.s32 %v902, %v331
    %v911 = vadd.s32 %v902, %v332
    %v912 = vadd.s32 %v902, %v333
    %v913 = vadd.s32 %v902, %v334
    %v914 = vadd.s32 %v902, %v335
    %v915 = vadd.s32 %v902, %v336
    %v916 = vadd.s32 %v902, %v337
    %v917 = vadd.s32 %v902, %v338
    %v918 = vadd.s32 %v902, %v339
    %v919 = vadd.s32 %v902, %v340
    %v920 = vadd.s32 %v902, %v341
    %v921 = vadd.s32 %v902, %v342
    %v922 = vadd.s32 %v902, %v343
    %v923 = vadd.s32 %v902, %v344
    %v924 = vadd.s32 %v902, %v345
    %v925 = vadd.s32 %v902, %v346
    %v926 = vadd.s32 %v902, %v347
    %v927 = vadd.s32 %v902, %v348
    %v928 = vadd.s32 %v902, %v349
    %v929 = vadd.s32 %v902, %v350
    %v930 = vadd.s32 %v902, %v351
    %v931 = vadd.s32 %v902, %v352
    %v932 = vadd.s32 %v902, %v353
    %v933 = vadd.s32 %v902, %v354
    %v934 = vadd.s32 %v902, %v355
    %v935 = vadd.s32 %v902, %v356
    %v936 = vadd.s32 %v902, %v357
    %v937 = vadd.s32 %v902, %v358
    %v938 = vadd.s32 %v902, %v359
    %v939 = vadd.s32 %v902, %v360
    %v940 = vadd.s32 %v902, %v361
    %v941 = vadd.s32 %v902, %v362
    %v942 = vadd.s32 %v902, %v363
    %v943 = vadd.s32 %v902, %v364
    %v944 = vadd.s32 %v902, %v365
    %v945 = vadd.s32 %v902, %v366
    %v946 = vadd.s32 %v902, %v367
    %v947 = vadd.s32 %v902, %v368
    %v948 = vadd.s32 %v902, %v369
    %v949 = vadd.s32 %v902, %v370
    %v950 = vadd.s32 %v902, %v371
    %v951 = vadd.s32 %v902, %v372
    %v952 = vadd.s32 %v902, %v373
    %v953 = vadd.s32 %v902, %v374
    %v954 = vadd.s32 %v902, %v375
    %v955 = vadd.s32 %v902, %v376
    %v956 = vadd.s32 %v902, %v377
    %v957 = vadd.s32 %v902, %v378
    %v958 = vadd.s32 %v902, %v379
    %v959 = vadd.s32 %v902, %v380
    %v960 = vadd.s32 %v902, %v381
    %v961 = vadd.s32 %v902, %v382
    %v962 = vadd.s32 %v902, %v383
    %v963 = vadd.s32 %v902, %v384
    %v964 = vadd.s32 %v902, %v385
    %v965 = vadd.s32 %v902, %v386
    %v966 = vadd.s32 %v902, %v387
    %vm967 = vcmp.lt.s32.totalorder %v903, 1024
    %vm968 = vcmp.lt.s32.totalorder %v904, 1024
    %vm969 = vcmp.lt.s32.totalorder %v905, 1024
    %vm970 = vcmp.lt.s32.totalorder %v906, 1024
    %vm971 = vcmp.lt.s32.totalorder %v907, 1024
    %vm972 = vcmp.lt.s32.totalorder %v908, 1024
    %vm973 = vcmp.lt.s32.totalorder %v909, 1024
    %vm974 = vcmp.lt.s32.totalorder %v910, 1024
    %vm975 = vcmp.lt.s32.totalorder %v911, 1024
    %vm976 = vcmp.lt.s32.totalorder %v912, 1024
    %vm977 = vcmp.lt.s32.totalorder %v913, 1024
    %vm978 = vcmp.lt.s32.totalorder %v914, 1024
    %vm979 = vcmp.lt.s32.totalorder %v915, 1024
    %vm980 = vcmp.lt.s32.totalorder %v916, 1024
    %vm981 = vcmp.lt.s32.totalorder %v917, 1024
    %vm982 = vcmp.lt.s32.totalorder %v918, 1024
    %vm983 = vcmp.lt.s32.totalorder %v919, 1024
    %vm984 = vcmp.lt.s32.totalorder %v920, 1024
    %vm985 = vcmp.lt.s32.totalorder %v921, 1024
    %vm986 = vcmp.lt.s32.totalorder %v922, 1024
    %vm987 = vcmp.lt.s32.totalorder %v923, 1024
    %vm988 = vcmp.lt.s32.totalorder %v924, 1024
    %vm989 = vcmp.lt.s32.totalorder %v925, 1024
    %vm990 = vcmp.lt.s32.totalorder %v926, 1024
    %vm991 = vcmp.lt.s32.totalorder %v927, 1024
    %vm992 = vcmp.lt.s32.totalorder %v928, 1024
    %vm993 = vcmp.lt.s32.totalorder %v929, 1024
    %vm994 = vcmp.lt.s32.totalorder %v930, 1024
    %vm995 = vcmp.lt.s32.totalorder %v931, 1024
    %vm996 = vcmp.lt.s32.totalorder %v932, 1024
    %vm997 = vcmp.lt.s32.totalorder %v933, 1024
    %vm998 = vcmp.lt.s32.totalorder %v934, 1024
    %vm999 = vcmp.lt.s32.totalorder %v935, 1024
    %vm1000 = vcmp.lt.s32.totalorder %v936, 1024
    %vm1001 = vcmp.lt.s32.totalorder %v937, 1024
    %vm1002 = vcmp.lt.s32.totalorder %v938, 1024
    %vm1003 = vcmp.lt.s32.totalorder %v939, 1024
    %vm1004 = vcmp.lt.s32.totalorder %v940, 1024
    %vm1005 = vcmp.lt.s32.totalorder %v941, 1024
    %vm1006 = vcmp.lt.s32.totalorder %v942, 1024
    %vm1007 = vcmp.lt.s32.totalorder %v943, 1024
    %vm1008 = vcmp.lt.s32.totalorder %v944, 1024
    %vm1009 = vcmp.lt.s32.totalorder %v945, 1024
    %vm1010 = vcmp.lt.s32.totalorder %v946, 1024
    %vm1011 = vcmp.lt.s32.totalorder %v947, 1024
    %vm1012 = vcmp.lt.s32.totalorder %v948, 1024
    %vm1013 = vcmp.lt.s32.totalorder %v949, 1024
    %vm1014 = vcmp.lt.s32.totalorder %v950, 1024
    %vm1015 = vcmp.lt.s32.totalorder %v951, 1024
    %vm1016 = vcmp.lt.s32.totalorder %v952, 1024
    %vm1017 = vcmp.lt.s32.totalorder %v953, 1024
    %vm1018 = vcmp.lt.s32.totalorder %v954, 1024
    %vm1019 = vcmp.lt.s32.totalorder %v955, 1024
    %vm1020 = vcmp.lt.s32.totalorder %v956, 1024
    %vm1021 = vcmp.lt.s32.totalorder %v957, 1024
    %vm1022 = vcmp.lt.s32.totalorder %v958, 1024
    %vm1023 = vcmp.lt.s32.totalorder %v959, 1024
    %vm1024 = vcmp.lt.s32.totalorder %v960, 1024
    %vm1025 = vcmp.lt.s32.totalorder %v961, 1024
    %vm1026 = vcmp.lt.s32.totalorder %v962, 1024
    %vm1027 = vcmp.lt.s32.totalorder %v963, 1024
    %vm1028 = vcmp.lt.s32.totalorder %v964, 1024
    %vm1029 = vcmp.lt.s32.totalorder %v965, 1024
    %vm1030 = vcmp.lt.s32.totalorder %v966, 1024
    %v1031 = vsel %vm967, %v837, 0.0
    %v1032 = vsel %vm968, %v838, 0.0
    %v1033 = vsel %vm969, %v839, 0.0
    %v1034 = vsel %vm970, %v840, 0.0
    %v1035 = vsel %vm971, %v841, 0.0
    %v1036 = vsel %vm972, %v842, 0.0
    %v1037 = vsel %vm973, %v843, 0.0
    %v1038 = vsel %vm974, %v844, 0.0
    %v1039 = vsel %vm975, %v845, 0.0
    %v1040 = vsel %vm976, %v846, 0.0
    %v1041 = vsel %vm977, %v847, 0.0
    %v1042 = vsel %vm978, %v848, 0.0
    %v1043 = vsel %vm979, %v849, 0.0
    %v1044 = vsel %vm980, %v850, 0.0
    %v1045 = vsel %vm981, %v851, 0.0
    %v1046 = vsel %vm982, %v852, 0.0
    %v1047 = vsel %vm983, %v853, 0.0
    %v1048 = vsel %vm984, %v854, 0.0
    %v1049 = vsel %vm985, %v855, 0.0
    %v1050 = vsel %vm986, %v856, 0.0
    %v1051 = vsel %vm987, %v857, 0.0
    %v1052 = vsel %vm988, %v858, 0.0
    %v1053 = vsel %vm989, %v859, 0.0
    %v1054 = vsel %vm990, %v860, 0.0
    %v1055 = vsel %vm991, %v861, 0.0
    %v1056 = vsel %vm992, %v862, 0.0
    %v1057 = vsel %vm993, %v863, 0.0
    %v1058 = vsel %vm994, %v864, 0.0
    %v1059 = vsel %vm995, %v865, 0.0
    %v1060 = vsel %vm996, %v866, 0.0
    %v1061 = vsel %vm997, %v867, 0.0
    %v1062 = vsel %vm998, %v868, 0.0
    %v1063 = vsel %vm999, %v869, 0.0
    %v1064 = vsel %vm1000, %v870, 0.0
    %v1065 = vsel %vm1001, %v871, 0.0
    %v1066 = vsel %vm1002, %v872, 0.0
    %v1067 = vsel %vm1003, %v873, 0.0
    %v1068 = vsel %vm1004, %v874, 0.0
    %v1069 = vsel %vm1005, %v875, 0.0
    %v1070 = vsel %vm1006, %v876, 0.0
    %v1071 = vsel %vm1007, %v877, 0.0
    %v1072 = vsel %vm1008, %v878, 0.0
    %v1073 = vsel %vm1009, %v879, 0.0
    %v1074 = vsel %vm1010, %v880, 0.0
    %v1075 = vsel %vm1011, %v881, 0.0
    %v1076 = vsel %vm1012, %v882, 0.0
    %v1077 = vsel %vm1013, %v883, 0.0
    %v1078 = vsel %vm1014, %v884, 0.0
    %v1079 = vsel %vm1015, %v885, 0.0
    %v1080 = vsel %vm1016, %v886, 0.0
    %v1081 = vsel %vm1017, %v887, 0.0
    %v1082 = vsel %vm1018, %v888, 0.0
    %v1083 = vsel %vm1019, %v889, 0.0
    %v1084 = vsel %vm1020, %v890, 0.0
    %v1085 = vsel %vm1021, %v891, 0.0
    %v1086 = vsel %vm1022, %v892, 0.0
    %v1087 = vsel %vm1023, %v893, 0.0
    %v1088 = vsel %vm1024, %v894, 0.0
    %v1089 = vsel %vm1025, %v895, 0.0
    %v1090 = vsel %vm1026, %v896, 0.0
    %v1091 = vsel %vm1027, %v897, 0.0
    %v1092 = vsel %vm1028, %v898, 0.0
    %v1093 = vsel %vm1029, %v899, 0.0
    %v1094 = vsel %vm1030, %v900, 0.0
    %v1095 = vadd.f32 %v1031, %v1032
    %v1096 = vadd.f32 %v1095, %v1033
    %v1097 = vadd.f32 %v1096, %v1034
    %v1098 = vadd.f32 %v1097, %v1035
    %v1099 = vadd.f32 %v1098, %v1036
    %v1100 = vadd.f32 %v1099, %v1037
    %v1101 = vadd.f32 %v1100, %v1038
    %v1102 = vadd.f32 %v1101, %v1039
    %v1103 = vadd.f32 %v1102, %v1040
    %v1104 = vadd.f32 %v1103, %v1041
    %v1105 = vadd.f32 %v1104, %v1042
    %v1106 = vadd.f32 %v1105, %v1043
    %v1107 = vadd.f32 %v1106, %v1044
    %v1108 = vadd.f32 %v1107, %v1045
    %v1109 = vadd.f32 %v1108, %v1046
    %v1110 = vadd.f32 %v1109, %v1047
    %v1111 = vadd.f32 %v1110, %v1048
    %v1112 = vadd.f32 %v1111, %v1049
    %v1113 = vadd.f32 %v1112, %v1050
    %v1114 = vadd.f32 %v1113, %v1051
    %v1115 = vadd.f32 %v1114, %v1052
    %v1116 = vadd.f32 %v1115, %v1053
    %v1117 = vadd.f32 %v1116, %v1054
    %v1118 = vadd.f32 %v1117, %v1055
    %v1119 = vadd.f32 %v1118, %v1056
    %v1120 = vadd.f32 %v1119, %v1057
    %v1121 = vadd.f32 %v1120, %v1058
    %v1122 = vadd.f32 %v1121, %v1059
    %v1123 = vadd.f32 %v1122, %v1060
    %v1124 = vadd.f32 %v1123, %v1061
    %v1125 = vadd.f32 %v1124, %v1062
    %v1126 = vadd.f32 %v1125, %v1063
    %v1127 = vadd.f32 %v1126, %v1064
    %v1128 = vadd.f32 %v1127, %v1065
    %v1129 = vadd.f32 %v1128, %v1066
    %v1130 = vadd.f32 %v1129, %v1067
    %v1131 = vadd.f32 %v1130, %v1068
    %v1132 = vadd.f32 %v1131, %v1069
    %v1133 = vadd.f32 %v1132, %v1070
    %v1134 = vadd.f32 %v1133, %v1071
    %v1135 = vadd.f32 %v1134, %v1072
    %v1136 = vadd.f32 %v1135, %v1073
    %v1137 = vadd.f32 %v1136, %v1074
    %v1138 = vadd.f32 %v1137, %v1075
    %v1139 = vadd.f32 %v1138, %v1076
    %v1140 = vadd.f32 %v1139, %v1077
    %v1141 = vadd.f32 %v1140, %v1078
    %v1142 = vadd.f32 %v1141, %v1079
    %v1143 = vadd.f32 %v1142, %v1080
    %v1144 = vadd.f32 %v1143, %v1081
    %v1145 = vadd.f32 %v1144, %v1082
    %v1146 = vadd.f32 %v1145, %v1083
    %v1147 = vadd.f32 %v1146, %v1084
    %v1148 = vadd.f32 %v1147, %v1085
    %v1149 = vadd.f32 %v1148, %v1086
    %v1150 = vadd.f32 %v1149, %v1087
    %v1151 = vadd.f32 %v1150, %v1088
    %v1152 = vadd.f32 %v1151, %v1089
    %v1153 = vadd.f32 %v1152, %v1090
    %v1154 = vadd.f32 %v1153, %v1091
    %v1155 = vadd.f32 %v1154, %v1092
    %v1156 = vadd.f32 %v1155, %v1093
    %v1157 = vadd.f32 %v1156, %v1094
    %v1158 = vadd.f32 %v644, %v1157
    %v1159 = vld [vmem:[#allocation7] sm:$0xff]
    %v1160 = vadd.f32 %v1159, %v1158
    %1161 = vst [vmem:[#allocation7] sm:$0xff] %v1160
    // Predicated region
    $region22: #{tpu_custom_call.1} parent=1 // pred_check
      _
    $region23: #{tpu_custom_call.1} parent=1 // pred_check_branch
      %1163 = sbr.rel (0) target = $region25
    $region24: #{tpu_custom_call.1} parent=1 // pred_region
      %s1165 = ssub.s32 128, 128
      %1166 = vsyncadd [#allocation4], %s1165
      %s1168 = sshll.u32 [#allocation7], 4
      %s1169 = int_to_ptr.vmem [resolvable:$true] %s1168
      %1171 = dma.vmem_to_hbm [thread:$0]  %s1169, 128, %s2, [#allocation4]
    $region25: #{tpu_custom_call.1} parent=1 // pred_fallthru
      _
    // Predicated region
    $region26: #{tpu_custom_call.1} parent=1 // pred_check
      _
    $region27: #{tpu_custom_call.1} parent=1 // pred_check_branch
      %1173 = sbr.rel (0) target = $region29
    $region28: #{tpu_custom_call.1} parent=1 // pred_region
      %1174 = dma.done [#allocation4], 128
    $region29: #{tpu_custom_call.1} parent=1 // pred_fallthru
      _
    %1175 = vsyncpa [#allocation3], 1
    %1176 = vsyncpa [#allocation6], 1
    %1177 = vsyncpa [#allocation4], 1

</llo_original>
